<compile_context>
chip_gen: v6e
topology: v6e:2x2x1
jax: 0.10.0
libtpu: 0.0.40
codegen_flags: <defaults>
</compile_context>

<pallas_src>
import functools
import math

import jax
import jax.numpy as jnp
from jax.experimental import pallas as pl
from jax.experimental.pallas import tpu as pltpu

# Plane layout of the packed parameter slab.
_TAP1, _TAP2, _SHIFT1, _SHIFT2, _NPLANES = 0, 9, 18, 19, 20


def _downds_kernel(x_ref, dwst_ref, pw_ref, o_ref, *, W2):
    """Fused (DW3x3 -> PW1x1 -> folded BN -> ReLU) x 2 on a lane-dense (CP, TL) tile.

    x_ref    : (CP, TL)       pooled activations; channels on sublanes, lanes = flat n,h,w
    dwst_ref : (20, CP, TL)   planes 0-8 / 9-17: per-tap depthwise weights (boundary masks
                              baked in, lane-broadcast); planes 18/19: per-channel shifts
    pw_ref   : (2, CP, CP)    pointwise weights with the BN scale folded in
    """
    x = x_ref[...]
    TL = x.shape[-1]

    def ds_block(inp, tap_base, shift_plane, pw_plane):
        # Depthwise 3x3: 8 lane rolls + 9 FMAs against mask-baked, pre-broadcast weights,
        # accumulated in three independent chains (ILP for the 4 VALU slots).
        def tap(k):
            dy, dx = k // 3 - 1, k % 3 - 1
            d = dy * W2 + dx
            rolled = inp if d == 0 else pltpu.roll(inp, (-d) % TL, axis=1)
            return rolled * dwst_ref[tap_base + k]

        acc = ((tap(0) + tap(1) + tap(2))
               + (tap(3) + tap(4) + tap(5))
               + (tap(6) + tap(7) + tap(8)))

        # Pointwise 1x1 (+ folded BN scale) on the MXU; shift + ReLU on the VPU.
        y = jnp.dot(pw_ref[pw_plane], acc, preferred_element_type=jnp.float32)
        return jnp.maximum(y + dwst_ref[shift_plane], 0.0)

    y1 = ds_block(x, _TAP1, _SHIFT1, 0)
    o_ref[...] = ds_block(y1, _TAP2, _SHIFT2, 1)


def _round_up(v, m):
    return (v + m - 1) // m * m


@jax.jit
def downds_forward(x_nchw, params):
    (wdw1, bdw1, wpw1, s1, t1, wdw2, bdw2, wpw2, s2, t2) = params
    N, C_in, H, W = x_nchw.shape
    H2, W2 = H // 2, W // 2                       # MaxPool2d(2) floors odd sizes
    C_mid = wpw1.shape[0]
    C_out = wpw2.shape[0]
    CP = _round_up(max(C_in, C_mid, C_out), 8)    # one channel pad for every slab
    L = N * H2 * W2
    HW = H2 * W2

    # Lane tile: whole pooled images, 128-lane aligned (keeps the roll/mask trick exact).
    lcm = HW * 128 // math.gcd(HW, 128)
    assert L % lcm == 0, "N*H2*W2 must tile into 128-aligned whole pooled images"
    TL = lcm
    while TL < 1024 and L % (2 * TL) == 0:        # grow the tile when L is large
        TL *= 2

    # ---- 2x2 max-pool + layout plumbing in the XLA wrapper (pool BEFORE the transpose
    # ---- so the layout copy moves the 4x-smaller pooled tensor).
    xp = x_nchw[:, :, :2 * H2, :2 * W2].reshape(N, C_in, H2, 2, W2, 2).max(axis=(3, 5))
    x_slab = jnp.transpose(xp, (1, 0, 2, 3)).reshape(C_in, L)
    x_slab = jnp.pad(x_slab, ((0, CP - C_in), (0, 0)))          # (CP, L)

    # ---- Host-side parameter folding / packing: 10 tiny arrays -> 2 slabs.
    lane = jnp.arange(TL, dtype=jnp.int32)
    w_pos = lane % W2
    h_pos = (lane // W2) % H2

    def dw_planes(wdw, c):
        planes = []
        for k in range(9):
            dy, dx = k // 3 - 1, k % 3 - 1
            valid = ((h_pos + dy >= 0) & (h_pos + dy < H2)
                     & (w_pos + dx >= 0) & (w_pos + dx < W2)).astype(jnp.float32)
            wcol = jnp.zeros((CP,), jnp.float32).at[:c].set(wdw[:, k])
            planes.append(wcol[:, None] * valid[None, :])        # (CP, TL), mask baked in
        return planes

    def shift_plane(t, s, wpw, bdw, c):
        t_fold = t + s * (wpw @ bdw)     # depthwise bias folded through pointwise + BN
        col = jnp.zeros((CP, 1), jnp.float32).at[:c].set(t_fold)
        return jnp.broadcast_to(col, (CP, TL))

    dwst = jnp.stack(
        dw_planes(wdw1, C_in) + dw_planes(wdw2, C_mid)
        + [shift_plane(t1, s1, wpw1, bdw1, C_mid),
           shift_plane(t2, s2, wpw2, bdw2, C_out)], axis=0)      # (20, CP, TL)

    pw = jnp.zeros((2, CP, CP), jnp.float32)
    pw = pw.at[0, :C_mid, :C_in].set(s1 * wpw1)   # BN scale folded into pointwise weights
    pw = pw.at[1, :C_out, :C_mid].set(s2 * wpw2)

    out_slab = pl.pallas_call(
        functools.partial(_downds_kernel, W2=W2),
        out_shape=jax.ShapeDtypeStruct((CP, L), jnp.float32),
        grid=(L // TL,),
        in_specs=[
            pl.BlockSpec((CP, TL), lambda i: (0, i)),
            pl.BlockSpec((_NPLANES, CP, TL), lambda i: (0, 0, 0)),   # resident weights
            pl.BlockSpec((2, CP, CP), lambda i: (0, 0, 0)),          # resident weights
        ],
        out_specs=pl.BlockSpec((CP, TL), lambda i: (0, i)),
        compiler_params=pltpu.CompilerParams(dimension_semantics=("parallel",)),
    )(x_slab, dwst, pw)

    out = out_slab[:C_out].reshape(C_out, N, H2, W2)
    return jnp.transpose(out, (1, 0, 2, 3))                      # back to NCHW


def make_params(key, c_in, c_mid, c_out):
    """Deterministic synthetic parameters. BN is folded into (scale, shift) (eval mode)."""
    ks = jax.random.split(key, 16)
    eps = 1e-5

    def bn_fold(kg, kb, km, kv, kbias, c):
        gamma = 1.0 + 0.1 * jax.random.normal(kg, (c,), jnp.float32)
        beta = 0.1 * jax.random.normal(kb, (c,), jnp.float32)
        mean = 0.05 * jax.random.normal(km, (c,), jnp.float32)
        var = 1.0 + 0.1 * jnp.abs(jax.random.normal(kv, (c,), jnp.float32))
        b_pw = 0.1 * jax.random.normal(kbias, (c,), jnp.float32)
        s = gamma / jnp.sqrt(var + eps)
        t = (b_pw - mean) * s + beta
        return s.reshape(c, 1), t.reshape(c, 1)

    wdw1 = 0.25 * jax.random.normal(ks[0], (c_in, 9), jnp.float32)      # [c, ky*3+kx]
    bdw1 = 0.10 * jax.random.normal(ks[1], (c_in, 1), jnp.float32)
    wpw1 = 0.25 * jax.random.normal(ks[2], (c_mid, c_in), jnp.float32)  # [c_out, c_in]
    s1, t1 = bn_fold(ks[3], ks[4], ks[5], ks[6], ks[7], c_mid)

    wdw2 = 0.25 * jax.random.normal(ks[8], (c_mid, 9), jnp.float32)
    bdw2 = 0.10 * jax.random.normal(ks[9], (c_mid, 1), jnp.float32)
    wpw2 = 0.25 * jax.random.normal(ks[10], (c_out, c_mid), jnp.float32)
    s2, t2 = bn_fold(ks[11], ks[12], ks[13], ks[14], ks[15], c_out)

    return (wdw1, bdw1, wpw1, s1, t1, wdw2, bdw2, wpw2, s2, t2)


def ref_forward(x_nchw, params):
    """Pure-JAX (XLA) reference of the same forward pass, in NCHW, unfolded params."""
    (wdw1, bdw1, wpw1, s1, t1, wdw2, bdw2, wpw2, s2, t2) = params
    N, C, H, W = x_nchw.shape
    H2, W2 = H // 2, W // 2
    xp = x_nchw[:, :, :2 * H2, :2 * W2].reshape(N, C, H2, 2, W2, 2).max(axis=(3, 5))

    def block(x, wdw, bdw, wpw, s, t):
        cb = x.shape[1]
        cout = wpw.shape[0]
        wk = wdw.reshape(cb, 3, 3)[:, None, :, :]                        # (C,1,3,3) OIHW
        y = jax.lax.conv_general_dilated(
            x, wk, (1, 1), ((1, 1), (1, 1)),
            dimension_numbers=("NCHW", "OIHW", "NCHW"),
            feature_group_count=cb)
        y = y + bdw.reshape(1, cb, 1, 1)
        wp = wpw[:, :, None, None]                                       # (Cout,Cin,1,1)
        y = jax.lax.conv_general_dilated(
            y, wp, (1, 1), ((0, 0), (0, 0)),
            dimension_numbers=("NCHW", "OIHW", "NCHW"))
        y = y * s.reshape(1, cout, 1, 1) + t.reshape(1, cout, 1, 1)
        return jnp.maximum(y, 0.0)

    y1 = block(xp, wdw1, bdw1, wpw1, s1, t1)
    return block(y1, wdw2, bdw2, wpw2, s2, t2)


if __name__ == "__main__":
    key = jax.random.PRNGKey(0)
    kx, kp = jax.random.split(key)

    N, C_in, H, W = 2, 4, 16, 16
    C_out = 8                      # DownDS(in_channels=4, out_channels=8), mid = out
    x = jax.random.normal(kx, (N, C_in, H, W), jnp.float32)
    params = make_params(kp, C_in, C_out, C_out)

    y = downds_forward(x, params)
    y = jax.block_until_ready(y)

    assert y.shape == (N, C_out, H // 2, W // 2), y.shape

    y_ref = ref_forward(x, params)
    if not jnp.allclose(y, y_ref, atol=2e-3, rtol=2e-3):
        max_err = float(jnp.max(jnp.abs(y - y_ref)))
        raise AssertionError(f"kernel/reference mismatch, max abs err {max_err}")

    print("KERNEL_OK")
</pallas_src>

<mosaic_0001>
module attributes {stable_mosaic.version = 11 : i64} {
  func.func @_downds_kernel(%arg0: i32, %arg1: memref<8x128xf32, #tpu.memory_space<vmem>>, %arg2: memref<20x8x128xf32, #tpu.memory_space<vmem>>, %arg3: memref<2x8x8xf32, #tpu.memory_space<vmem>>, %arg4: memref<8x128xf32, #tpu.memory_space<vmem>>) attributes {dimension_semantics = [#tpu.dimension_semantics<parallel>], iteration_bounds = array<i64: 1>, scalar_prefetch = 0 : i64, scratch_operands = 0 : i64, tpu.core_type = #tpu.core_type<tc>, window_params = [{transform_indices = @transform_0, window_bounds = array<i64: 8, 128>}, {pipeline_mode = #tpu.pipeline_mode<synchronous>, transform_indices = @transform_1, window_bounds = array<i64: 20, 8, 128>}, {pipeline_mode = #tpu.pipeline_mode<synchronous>, transform_indices = @transform_2, window_bounds = array<i64: 2, 8, 8>}, {transform_indices = @transform_3, window_bounds = array<i64: 8, 128>}]} {
    %c0 = arith.constant 0 : index
    %c0_0 = arith.constant 0 : index
    %0 = vector.load %arg1[%c0, %c0_0] : memref<8x128xf32, #tpu.memory_space<vmem>>, vector<8x128xf32>
    %c9_i32 = arith.constant 9 : i32
    %1 = tpu.dynamic_rotate %0 by %c9_i32 dim 1 : vector<8x128xf32>, i32 -> vector<8x128xf32>
    %c0_1 = arith.constant 0 : index
    %c0_2 = arith.constant 0 : index
    %c0_3 = arith.constant 0 : index
    %2 = vector.load %arg2[%c0_1, %c0_2, %c0_3] : memref<20x8x128xf32, #tpu.memory_space<vmem>>, vector<1x8x128xf32>
    %3 = vector.shape_cast %2 : vector<1x8x128xf32> to vector<8x128xf32>
    %4 = arith.mulf %1, %3 : vector<8x128xf32>
    %c8_i32 = arith.constant 8 : i32
    %5 = tpu.dynamic_rotate %0 by %c8_i32 dim 1 : vector<8x128xf32>, i32 -> vector<8x128xf32>
    %c1 = arith.constant 1 : index
    %c0_4 = arith.constant 0 : index
    %c0_5 = arith.constant 0 : index
    %6 = vector.load %arg2[%c1, %c0_4, %c0_5] : memref<20x8x128xf32, #tpu.memory_space<vmem>>, vector<1x8x128xf32>
    %7 = vector.shape_cast %6 : vector<1x8x128xf32> to vector<8x128xf32>
    %8 = arith.mulf %5, %7 : vector<8x128xf32>
    %9 = arith.addf %4, %8 : vector<8x128xf32>
    %c7_i32 = arith.constant 7 : i32
    %10 = tpu.dynamic_rotate %0 by %c7_i32 dim 1 : vector<8x128xf32>, i32 -> vector<8x128xf32>
    %c2 = arith.constant 2 : index
    %c0_6 = arith.constant 0 : index
    %c0_7 = arith.constant 0 : index
    %11 = vector.load %arg2[%c2, %c0_6, %c0_7] : memref<20x8x128xf32, #tpu.memory_space<vmem>>, vector<1x8x128xf32>
    %12 = vector.shape_cast %11 : vector<1x8x128xf32> to vector<8x128xf32>
    %13 = arith.mulf %10, %12 : vector<8x128xf32>
    %14 = arith.addf %9, %13 : vector<8x128xf32>
    %c1_i32 = arith.constant 1 : i32
    %15 = tpu.dynamic_rotate %0 by %c1_i32 dim 1 : vector<8x128xf32>, i32 -> vector<8x128xf32>
    %c3 = arith.constant 3 : index
    %c0_8 = arith.constant 0 : index
    %c0_9 = arith.constant 0 : index
    %16 = vector.load %arg2[%c3, %c0_8, %c0_9] : memref<20x8x128xf32, #tpu.memory_space<vmem>>, vector<1x8x128xf32>
    %17 = vector.shape_cast %16 : vector<1x8x128xf32> to vector<8x128xf32>
    %18 = arith.mulf %15, %17 : vector<8x128xf32>
    %c4 = arith.constant 4 : index
    %c0_10 = arith.constant 0 : index
    %c0_11 = arith.constant 0 : index
    %19 = vector.load %arg2[%c4, %c0_10, %c0_11] : memref<20x8x128xf32, #tpu.memory_space<vmem>>, vector<1x8x128xf32>
    %20 = vector.shape_cast %19 : vector<1x8x128xf32> to vector<8x128xf32>
    %21 = arith.mulf %0, %20 : vector<8x128xf32>
    %22 = arith.addf %18, %21 : vector<8x128xf32>
    %c127_i32 = arith.constant 127 : i32
    %23 = tpu.dynamic_rotate %0 by %c127_i32 dim 1 : vector<8x128xf32>, i32 -> vector<8x128xf32>
    %c5 = arith.constant 5 : index
    %c0_12 = arith.constant 0 : index
    %c0_13 = arith.constant 0 : index
    %24 = vector.load %arg2[%c5, %c0_12, %c0_13] : memref<20x8x128xf32, #tpu.memory_space<vmem>>, vector<1x8x128xf32>
    %25 = vector.shape_cast %24 : vector<1x8x128xf32> to vector<8x128xf32>
    %26 = arith.mulf %23, %25 : vector<8x128xf32>
    %27 = arith.addf %22, %26 : vector<8x128xf32>
    %28 = arith.addf %14, %27 : vector<8x128xf32>
    %c121_i32 = arith.constant 121 : i32
    %29 = tpu.dynamic_rotate %0 by %c121_i32 dim 1 : vector<8x128xf32>, i32 -> vector<8x128xf32>
    %c6 = arith.constant 6 : index
    %c0_14 = arith.constant 0 : index
    %c0_15 = arith.constant 0 : index
    %30 = vector.load %arg2[%c6, %c0_14, %c0_15] : memref<20x8x128xf32, #tpu.memory_space<vmem>>, vector<1x8x128xf32>
    %31 = vector.shape_cast %30 : vector<1x8x128xf32> to vector<8x128xf32>
    %32 = arith.mulf %29, %31 : vector<8x128xf32>
    %c120_i32 = arith.constant 120 : i32
    %33 = tpu.dynamic_rotate %0 by %c120_i32 dim 1 : vector<8x128xf32>, i32 -> vector<8x128xf32>
    %c7 = arith.constant 7 : index
    %c0_16 = arith.constant 0 : index
    %c0_17 = arith.constant 0 : index
    %34 = vector.load %arg2[%c7, %c0_16, %c0_17] : memref<20x8x128xf32, #tpu.memory_space<vmem>>, vector<1x8x128xf32>
    %35 = vector.shape_cast %34 : vector<1x8x128xf32> to vector<8x128xf32>
    %36 = arith.mulf %33, %35 : vector<8x128xf32>
    %37 = arith.addf %32, %36 : vector<8x128xf32>
    %c119_i32 = arith.constant 119 : i32
    %38 = tpu.dynamic_rotate %0 by %c119_i32 dim 1 : vector<8x128xf32>, i32 -> vector<8x128xf32>
    %c8 = arith.constant 8 : index
    %c0_18 = arith.constant 0 : index
    %c0_19 = arith.constant 0 : index
    %39 = vector.load %arg2[%c8, %c0_18, %c0_19] : memref<20x8x128xf32, #tpu.memory_space<vmem>>, vector<1x8x128xf32>
    %40 = vector.shape_cast %39 : vector<1x8x128xf32> to vector<8x128xf32>
    %41 = arith.mulf %38, %40 : vector<8x128xf32>
    %42 = arith.addf %37, %41 : vector<8x128xf32>
    %43 = arith.addf %28, %42 : vector<8x128xf32>
    %c0_20 = arith.constant 0 : index
    %c0_21 = arith.constant 0 : index
    %c0_22 = arith.constant 0 : index
    %44 = vector.load %arg3[%c0_20, %c0_21, %c0_22] : memref<2x8x8xf32, #tpu.memory_space<vmem>>, vector<1x8x8xf32>
    %45 = vector.shape_cast %44 : vector<1x8x8xf32> to vector<8x8xf32>
    %cst = arith.constant dense<0.000000e+00> : vector<8x128xf32>
    %46 = tpu.matmul %45, %43, %cst {dimension_numbers = #tpu.dot_dimension_numbers<[1], [0], [0], [1], [0, 0, 1, 1], [], []>} : vector<8x8xf32>, vector<8x128xf32>, vector<8x128xf32> -> vector<8x128xf32>
    %c18 = arith.constant 18 : index
    %c0_23 = arith.constant 0 : index
    %c0_24 = arith.constant 0 : index
    %47 = vector.load %arg2[%c18, %c0_23, %c0_24] : memref<20x8x128xf32, #tpu.memory_space<vmem>>, vector<1x8x128xf32>
    %48 = vector.shape_cast %47 : vector<1x8x128xf32> to vector<8x128xf32>
    %49 = arith.addf %46, %48 : vector<8x128xf32>
    %cst_25 = arith.constant 0.000000e+00 : f32
    %50 = vector.broadcast %cst_25 : f32 to vector<8x128xf32>
    %51 = arith.maximumf %49, %50 : vector<8x128xf32>
    %c9_i32_26 = arith.constant 9 : i32
    %52 = tpu.dynamic_rotate %51 by %c9_i32_26 dim 1 : vector<8x128xf32>, i32 -> vector<8x128xf32>
    %c9 = arith.constant 9 : index
    %c0_27 = arith.constant 0 : index
    %c0_28 = arith.constant 0 : index
    %53 = vector.load %arg2[%c9, %c0_27, %c0_28] : memref<20x8x128xf32, #tpu.memory_space<vmem>>, vector<1x8x128xf32>
    %54 = vector.shape_cast %53 : vector<1x8x128xf32> to vector<8x128xf32>
    %55 = arith.mulf %52, %54 : vector<8x128xf32>
    %c8_i32_29 = arith.constant 8 : i32
    %56 = tpu.dynamic_rotate %51 by %c8_i32_29 dim 1 : vector<8x128xf32>, i32 -> vector<8x128xf32>
    %c10 = arith.constant 10 : index
    %c0_30 = arith.constant 0 : index
    %c0_31 = arith.constant 0 : index
    %57 = vector.load %arg2[%c10, %c0_30, %c0_31] : memref<20x8x128xf32, #tpu.memory_space<vmem>>, vector<1x8x128xf32>
    %58 = vector.shape_cast %57 : vector<1x8x128xf32> to vector<8x128xf32>
    %59 = arith.mulf %56, %58 : vector<8x128xf32>
    %60 = arith.addf %55, %59 : vector<8x128xf32>
    %c7_i32_32 = arith.constant 7 : i32
    %61 = tpu.dynamic_rotate %51 by %c7_i32_32 dim 1 : vector<8x128xf32>, i32 -> vector<8x128xf32>
    %c11 = arith.constant 11 : index
    %c0_33 = arith.constant 0 : index
    %c0_34 = arith.constant 0 : index
    %62 = vector.load %arg2[%c11, %c0_33, %c0_34] : memref<20x8x128xf32, #tpu.memory_space<vmem>>, vector<1x8x128xf32>
    %63 = vector.shape_cast %62 : vector<1x8x128xf32> to vector<8x128xf32>
    %64 = arith.mulf %61, %63 : vector<8x128xf32>
    %65 = arith.addf %60, %64 : vector<8x128xf32>
    %c1_i32_35 = arith.constant 1 : i32
    %66 = tpu.dynamic_rotate %51 by %c1_i32_35 dim 1 : vector<8x128xf32>, i32 -> vector<8x128xf32>
    %c12 = arith.constant 12 : index
    %c0_36 = arith.constant 0 : index
    %c0_37 = arith.constant 0 : index
    %67 = vector.load %arg2[%c12, %c0_36, %c0_37] : memref<20x8x128xf32, #tpu.memory_space<vmem>>, vector<1x8x128xf32>
    %68 = vector.shape_cast %67 : vector<1x8x128xf32> to vector<8x128xf32>
    %69 = arith.mulf %66, %68 : vector<8x128xf32>
    %c13 = arith.constant 13 : index
    %c0_38 = arith.constant 0 : index
    %c0_39 = arith.constant 0 : index
    %70 = vector.load %arg2[%c13, %c0_38, %c0_39] : memref<20x8x128xf32, #tpu.memory_space<vmem>>, vector<1x8x128xf32>
    %71 = vector.shape_cast %70 : vector<1x8x128xf32> to vector<8x128xf32>
    %72 = arith.mulf %51, %71 : vector<8x128xf32>
    %73 = arith.addf %69, %72 : vector<8x128xf32>
    %c127_i32_40 = arith.constant 127 : i32
    %74 = tpu.dynamic_rotate %51 by %c127_i32_40 dim 1 : vector<8x128xf32>, i32 -> vector<8x128xf32>
    %c14 = arith.constant 14 : index
    %c0_41 = arith.constant 0 : index
    %c0_42 = arith.constant 0 : index
    %75 = vector.load %arg2[%c14, %c0_41, %c0_42] : memref<20x8x128xf32, #tpu.memory_space<vmem>>, vector<1x8x128xf32>
    %76 = vector.shape_cast %75 : vector<1x8x128xf32> to vector<8x128xf32>
    %77 = arith.mulf %74, %76 : vector<8x128xf32>
    %78 = arith.addf %73, %77 : vector<8x128xf32>
    %79 = arith.addf %65, %78 : vector<8x128xf32>
    %c121_i32_43 = arith.constant 121 : i32
    %80 = tpu.dynamic_rotate %51 by %c121_i32_43 dim 1 : vector<8x128xf32>, i32 -> vector<8x128xf32>
    %c15 = arith.constant 15 : index
    %c0_44 = arith.constant 0 : index
    %c0_45 = arith.constant 0 : index
    %81 = vector.load %arg2[%c15, %c0_44, %c0_45] : memref<20x8x128xf32, #tpu.memory_space<vmem>>, vector<1x8x128xf32>
    %82 = vector.shape_cast %81 : vector<1x8x128xf32> to vector<8x128xf32>
    %83 = arith.mulf %80, %82 : vector<8x128xf32>
    %c120_i32_46 = arith.constant 120 : i32
    %84 = tpu.dynamic_rotate %51 by %c120_i32_46 dim 1 : vector<8x128xf32>, i32 -> vector<8x128xf32>
    %c16 = arith.constant 16 : index
    %c0_47 = arith.constant 0 : index
    %c0_48 = arith.constant 0 : index
    %85 = vector.load %arg2[%c16, %c0_47, %c0_48] : memref<20x8x128xf32, #tpu.memory_space<vmem>>, vector<1x8x128xf32>
    %86 = vector.shape_cast %85 : vector<1x8x128xf32> to vector<8x128xf32>
    %87 = arith.mulf %84, %86 : vector<8x128xf32>
    %88 = arith.addf %83, %87 : vector<8x128xf32>
    %c119_i32_49 = arith.constant 119 : i32
    %89 = tpu.dynamic_rotate %51 by %c119_i32_49 dim 1 : vector<8x128xf32>, i32 -> vector<8x128xf32>
    %c17 = arith.constant 17 : index
    %c0_50 = arith.constant 0 : index
    %c0_51 = arith.constant 0 : index
    %90 = vector.load %arg2[%c17, %c0_50, %c0_51] : memref<20x8x128xf32, #tpu.memory_space<vmem>>, vector<1x8x128xf32>
    %91 = vector.shape_cast %90 : vector<1x8x128xf32> to vector<8x128xf32>
    %92 = arith.mulf %89, %91 : vector<8x128xf32>
    %93 = arith.addf %88, %92 : vector<8x128xf32>
    %94 = arith.addf %79, %93 : vector<8x128xf32>
    %c1_52 = arith.constant 1 : index
    %c0_53 = arith.constant 0 : index
    %c0_54 = arith.constant 0 : index
    %95 = vector.load %arg3[%c1_52, %c0_53, %c0_54] : memref<2x8x8xf32, #tpu.memory_space<vmem>>, vector<1x8x8xf32>
    %96 = vector.shape_cast %95 : vector<1x8x8xf32> to vector<8x8xf32>
    %cst_55 = arith.constant dense<0.000000e+00> : vector<8x128xf32>
    %97 = tpu.matmul %96, %94, %cst_55 {dimension_numbers = #tpu.dot_dimension_numbers<[1], [0], [0], [1], [0, 0, 1, 1], [], []>} : vector<8x8xf32>, vector<8x128xf32>, vector<8x128xf32> -> vector<8x128xf32>
    %c19 = arith.constant 19 : index
    %c0_56 = arith.constant 0 : index
    %c0_57 = arith.constant 0 : index
    %98 = vector.load %arg2[%c19, %c0_56, %c0_57] : memref<20x8x128xf32, #tpu.memory_space<vmem>>, vector<1x8x128xf32>
    %99 = vector.shape_cast %98 : vector<1x8x128xf32> to vector<8x128xf32>
    %100 = arith.addf %97, %99 : vector<8x128xf32>
    %cst_58 = arith.constant 0.000000e+00 : f32
    %101 = vector.broadcast %cst_58 : f32 to vector<8x128xf32>
    %102 = arith.maximumf %100, %101 : vector<8x128xf32>
    %c0_59 = arith.constant 0 : index
    %c0_60 = arith.constant 0 : index
    %103 = vector.load %arg4[%c0_59, %c0_60] : memref<8x128xf32, #tpu.memory_space<vmem>>, vector<8x128xf32>
    tpu.vector_store %arg4[%c0_59, %c0_60], %102 {strides = array<i32>} : memref<8x128xf32, #tpu.memory_space<vmem>>, vector<8x128xf32>,
    return
  }
  func.func @transform_0(%arg0: i32) -> (i32, i32) {
    %c0_i32 = arith.constant 0 : i32
    %c0_i32_0 = arith.constant 0 : i32
    return %c0_i32, %arg0 : i32, i32
  }
  func.func @transform_1(%arg0: i32) -> (i32, i32, i32) {
    %c0_i32 = arith.constant 0 : i32
    %c0_i32_0 = arith.constant 0 : i32
    %c0_i32_1 = arith.constant 0 : i32
    %c0_i32_2 = arith.constant 0 : i32
    return %c0_i32, %c0_i32_0, %c0_i32_1 : i32, i32, i32
  }
  func.func @transform_2(%arg0: i32) -> (i32, i32, i32) {
    %c0_i32 = arith.constant 0 : i32
    %c0_i32_0 = arith.constant 0 : i32
    %c0_i32_1 = arith.constant 0 : i32
    %c0_i32_2 = arith.constant 0 : i32
    return %c0_i32, %c0_i32_0, %c0_i32_1 : i32, i32, i32
  }
  func.func @transform_3(%arg0: i32) -> (i32, i32) {
    %c0_i32 = arith.constant 0 : i32
    %c0_i32_0 = arith.constant 0 : i32
    return %c0_i32, %arg0 : i32, i32
  }
}

</mosaic_0001>

<llo_original>
// kernel: downds_forward.1
$region0: #{downds_forward.1}
  #allocation0 [shape = 'u32[]', space=smem, size = 0x4, offset = 0x4, fixed_abs, tag = 'smem constant byte address 0x4 - core index']
  #allocation1 [shape = 'u32[144,128]{1,0:T(1,128)}', space=vmem, size = 0x12000, scoped, tag = 'internal scratch']
  %s0 = inlined_call_operand.vmem [shape: f32[8,128], index: 0, kind: input, shape index: {}]
  %s1 = inlined_call_operand.vmem [shape: f32[20,8,128], index: 1, kind: input, shape index: {}]
  %s2 = inlined_call_operand.vmem [shape: f32[2,8,8], index: 2, kind: input, shape index: {}]
  %s3 = inlined_call_operand.vmem [shape: f32[8,128], index: 3, kind: output, shape index: {}]
  %s4 = sld [smem:[#allocation0]]
  $region22: #{downds_forward.1} parent=0
    _
  %s6 = ssub.s32 1, %s4
  %s7 = scalar_select 0, %s6, %s4
  // Predicated region
  $region2: #{downds_forward.1} parent=0 // pred_check
    _
  $region3: #{downds_forward.1} parent=0 // pred_check_branch
    %9 = sbr.rel (0) target = $region5
  $region4: #{downds_forward.1} parent=0 // pred_region
    _
  $region5: #{downds_forward.1} parent=0 // pred_fallthru
    _
  // Predicated region
  $region6: #{downds_forward.1} parent=0 // pred_check
    _
  $region7: #{downds_forward.1} parent=0 // pred_check_branch
    %11 = sbr.rel (0) target = $region9
  $region8: #{downds_forward.1} parent=0 // pred_region
    _
  $region9: #{downds_forward.1} parent=0 // pred_fallthru
    _
  // Predicated region
  $region10: #{downds_forward.1} parent=0 // pred_check
    _
  $region11: #{downds_forward.1} parent=0 // pred_check_branch
    %13 = sbr.rel (0) target = $region13
  $region12: #{downds_forward.1} parent=0 // pred_region
    _
  $region13: #{downds_forward.1} parent=0 // pred_fallthru
    _
  %v14 = vld [vmem:[%s0] sm:$0xff]
  %15 = vrot.lane.b32.xlu0 %v14, 9
  %v16 = vpop.permute.xlu0 %15
  %v17 = vld [vmem:[%s1] sm:$0xff]
  %v18 = vmul.f32 %v16, %v17
  %19 = vrot.lane.b32.xlu0 %v14, 8
  %v20 = vpop.permute.xlu0 %19
  %s21 = scalar_lea.vmem %s1, 8
  %v22 = vld [vmem:[%s21] sm:$0xff]
  %v23 = vmul.f32 %v20, %v22
  %v24 = vadd.f32 %v18, %v23
  %25 = vrot.lane.b32.xlu0 %v14, 7
  %v26 = vpop.permute.xlu0 %25
  %s27 = scalar_lea.vmem %s1, 16
  %v28 = vld [vmem:[%s27] sm:$0xff]
  %v29 = vmul.f32 %v26, %v28
  %v30 = vadd.f32 %v24, %v29
  %31 = vrot.lane.b32.xlu0 %v14, 1
  %v32 = vpop.permute.xlu0 %31
  %s33 = scalar_lea.vmem %s1, 24
  %v34 = vld [vmem:[%s33] sm:$0xff]
  %v35 = vmul.f32 %v32, %v34
  %s36 = scalar_lea.vmem %s1, 32
  %v37 = vld [vmem:[%s36] sm:$0xff]
  %v38 = vmul.f32 %v14, %v37
  %v39 = vadd.f32 %v35, %v38
  %40 = vrot.lane.b32.xlu0 %v14, 127
  %v41 = vpop.permute.xlu0 %40
  %s42 = scalar_lea.vmem %s1, 40
  %v43 = vld [vmem:[%s42] sm:$0xff]
  %v44 = vmul.f32 %v41, %v43
  %v45 = vadd.f32 %v39, %v44
  %v46 = vadd.f32 %v30, %v45
  %47 = vrot.lane.b32.xlu0 %v14, 121
  %v48 = vpop.permute.xlu0 %47
  %s49 = scalar_lea.vmem %s1, 48
  %v50 = vld [vmem:[%s49] sm:$0xff]
  %v51 = vmul.f32 %v48, %v50
  %52 = vrot.lane.b32.xlu0 %v14, 120
  %v53 = vpop.permute.xlu0 %52
  %s54 = scalar_lea.vmem %s1, 56
  %v55 = vld [vmem:[%s54] sm:$0xff]
  %v56 = vmul.f32 %v53, %v55
  %v57 = vadd.f32 %v51, %v56
  %58 = vrot.lane.b32.xlu0 %v14, 119
  %v59 = vpop.permute.xlu0 %58
  %s60 = scalar_lea.vmem %s1, 64
  %v61 = vld [vmem:[%s60] sm:$0xff]
  %v62 = vmul.f32 %v59, %v61
  %v63 = vadd.f32 %v57, %v62
  %v64 = vadd.f32 %v46, %v63
  %v65 = vld [vmem:[%s2] sm:$0xff]
  %s66 = scalar_lea.vmem %s1, 144
  %v67 = vld [vmem:[%s66] sm:$0xff]
  %vm68 = vcmask 64512
  %v70 = vsel %vm68, %v65, 0
  %72 = vmatprep.subr.mxu0 0.0
  %73 = vmatpush1.msra.mxu0 0.0
  %74 = vmatprep.subr.mxu0 0.0
  %75 = vmatpush1.msra.mxu0 0.0
  %76 = vmatprep.subr.mxu0 0.0
  %77 = vmatpush1.msra.mxu0 0.0
  %78 = vmatprep.subr.mxu0 0.0
  %79 = vmatpush1.msra.mxu0 0.0
  %80 = vmatprep.subr.mxu0 0.0
  %81 = vmatpush1.msra.mxu0 0.0
  %82 = vmatprep.subr.mxu0 0.0
  %83 = vmatpush1.msra.mxu0 0.0
  %84 = vmatprep.subr.mxu0 0.0
  %85 = vmatpush1.msra.mxu0 0.0
  %86 = vmatprep.subr.mxu0 0.0
  %87 = vmatpush1.msra.mxu0 0.0
  %88 = vmatprep.subr.mxu0 0.0
  %89 = vmatpush1.msra.mxu0 0.0
  %90 = vmatprep.subr.mxu0 0.0
  %91 = vmatpush1.msra.mxu0 0.0
  %92 = vmatprep.subr.mxu0 0.0
  %93 = vmatpush1.msra.mxu0 0.0
  %94 = vmatprep.subr.mxu0 0.0
  %95 = vmatpush1.msra.mxu0 0.0
  %96 = vmatprep.subr.mxu0 0.0
  %97 = vmatpush1.msra.mxu0 0.0
  %98 = vmatprep.subr.mxu0 0.0
  %99 = vmatpush1.msra.mxu0 0.0
  %100 = vmatprep.subr.mxu0 0.0
  %101 = vmatpush1.msra.mxu0 0.0
  %102 = vmatprep.subr.mxu0 0.0
  %103 = vmatpush1.msra.mxu0 %v64
  %104 = vmatprep.subr.mxu0 0.0
  %105 = vmatpush2.msra.mxu0 0.0
  %106 = vmatprep.subr.mxu0 0.0
  %107 = vmatpush2.msra.mxu0 0.0
  %108 = vmatprep.subr.mxu0 0.0
  %109 = vmatpush2.msra.mxu0 0.0
  %110 = vmatprep.subr.mxu0 0.0
  %111 = vmatpush2.msra.mxu0 0.0
  %112 = vmatprep.subr.mxu0 0.0
  %113 = vmatpush2.msra.mxu0 0.0
  %114 = vmatprep.subr.mxu0 0.0
  %115 = vmatpush2.msra.mxu0 0.0
  %116 = vmatprep.subr.mxu0 0.0
  %117 = vmatpush2.msra.mxu0 0.0
  %118 = vmatprep.subr.mxu0 0.0
  %119 = vmatpush2.msra.mxu0 0.0
  %120 = vmatprep.subr.mxu0 0.0
  %121 = vmatpush2.msra.mxu0 0.0
  %122 = vmatprep.subr.mxu0 0.0
  %123 = vmatpush2.msra.mxu0 0.0
  %124 = vmatprep.subr.mxu0 0.0
  %125 = vmatpush2.msra.mxu0 0.0
  %126 = vmatprep.subr.mxu0 0.0
  %127 = vmatpush2.msra.mxu0 0.0
  %128 = vmatprep.subr.mxu0 0.0
  %129 = vmatpush2.msra.mxu0 0.0
  %130 = vmatprep.subr.mxu0 0.0
  %131 = vmatpush2.msra.mxu0 0.0
  %132 = vmatprep.subr.mxu0 0.0
  %133 = vmatpush2.msra.mxu0 0.0
  %134 = vmatprep.subr.mxu0 0.0
  %135 = vmatpush2.msra.mxu0 0.0
  %136 = vmatprep.mubr.f32.mxu0 0.0
  %137 = vmatmul.mubr.f32.gmra.mxu0 %v70
  %v138 = vpop.f32.mrf.mxu0
  %v139 = vadd.f32 %v67, %v138
  %v140 = vpop.f32.mrf.mxu0
  %141 = vdwg.mxu0
  %v142 = vmax.f32 %v139, 0.0
  %143 = vrot.lane.b32.xlu0 %v142, 9
  %v144 = vpop.permute.xlu0 %143
  %s145 = scalar_lea.vmem %s1, 72
  %v146 = vld [vmem:[%s145] sm:$0xff]
  %v147 = vmul.f32 %v144, %v146
  %148 = vrot.lane.b32.xlu0 %v142, 8
  %v149 = vpop.permute.xlu0 %148
  %s150 = scalar_lea.vmem %s1, 80
  %v151 = vld [vmem:[%s150] sm:$0xff]
  %v152 = vmul.f32 %v149, %v151
  %v153 = vadd.f32 %v147, %v152
  %154 = vrot.lane.b32.xlu0 %v142, 7
  %v155 = vpop.permute.xlu0 %154
  %s156 = scalar_lea.vmem %s1, 88
  %v157 = vld [vmem:[%s156] sm:$0xff]
  %v158 = vmul.f32 %v155, %v157
  %v159 = vadd.f32 %v153, %v158
  %160 = vrot.lane.b32.xlu0 %v142, 1
  %v161 = vpop.permute.xlu0 %160
  %s162 = scalar_lea.vmem %s1, 96
  %v163 = vld [vmem:[%s162] sm:$0xff]
  %v164 = vmul.f32 %v161, %v163
  %s165 = scalar_lea.vmem %s1, 104
  %v166 = vld [vmem:[%s165] sm:$0xff]
  %v167 = vmul.f32 %v142, %v166
  %v168 = vadd.f32 %v164, %v167
  %169 = vrot.lane.b32.xlu0 %v142, 127
  %v170 = vpop.permute.xlu0 %169
  %s171 = scalar_lea.vmem %s1, 112
  %v172 = vld [vmem:[%s171] sm:$0xff]
  %v173 = vmul.f32 %v170, %v172
  %v174 = vadd.f32 %v168, %v173
  %v175 = vadd.f32 %v159, %v174
  %176 = vrot.lane.b32.xlu0 %v142, 121
  %v177 = vpop.permute.xlu0 %176
  %s178 = scalar_lea.vmem %s1, 120
  %v179 = vld [vmem:[%s178] sm:$0xff]
  %v180 = vmul.f32 %v177, %v179
  %181 = vrot.lane.b32.xlu0 %v142, 120
  %v182 = vpop.permute.xlu0 %181
  %s183 = scalar_lea.vmem %s1, 128
  %v184 = vld [vmem:[%s183] sm:$0xff]
  %v185 = vmul.f32 %v182, %v184
  %v186 = vadd.f32 %v180, %v185
  %187 = vrot.lane.b32.xlu0 %v142, 119
  %v188 = vpop.permute.xlu0 %187
  %s189 = scalar_lea.vmem %s1, 136
  %v190 = vld [vmem:[%s189] sm:$0xff]
  %v191 = vmul.f32 %v188, %v190
  %v192 = vadd.f32 %v186, %v191
  %v193 = vadd.f32 %v175, %v192
  %s194 = scalar_lea.vmem %s2, 8
  %v195 = vld [vmem:[%s194] sm:$0xff]
  %s196 = scalar_lea.vmem %s1, 152
  %v197 = vld [vmem:[%s196] sm:$0xff]
  %v199 = vsel %vm68, %v195, 0
  %201 = vmatprep.subr.mxu0 0.0
  %202 = vmatpush1.msra.mxu0 0.0
  %203 = vmatprep.subr.mxu0 0.0
  %204 = vmatpush1.msra.mxu0 0.0
  %205 = vmatprep.subr.mxu0 0.0
  %206 = vmatpush1.msra.mxu0 0.0
  %207 = vmatprep.subr.mxu0 0.0
  %208 = vmatpush1.msra.mxu0 0.0
  %209 = vmatprep.subr.mxu0 0.0
  %210 = vmatpush1.msra.mxu0 0.0
  %211 = vmatprep.subr.mxu0 0.0
  %212 = vmatpush1.msra.mxu0 0.0
  %213 = vmatprep.subr.mxu0 0.0
  %214 = vmatpush1.msra.mxu0 0.0
  %215 = vmatprep.subr.mxu0 0.0
  %216 = vmatpush1.msra.mxu0 0.0
  %217 = vmatprep.subr.mxu0 0.0
  %218 = vmatpush1.msra.mxu0 0.0
  %219 = vmatprep.subr.mxu0 0.0
  %220 = vmatpush1.msra.mxu0 0.0
  %221 = vmatprep.subr.mxu0 0.0
  %222 = vmatpush1.msra.mxu0 0.0
  %223 = vmatprep.subr.mxu0 0.0
  %224 = vmatpush1.msra.mxu0 0.0
  %225 = vmatprep.subr.mxu0 0.0
  %226 = vmatpush1.msra.mxu0 0.0
  %227 = vmatprep.subr.mxu0 0.0
  %228 = vmatpush1.msra.mxu0 0.0
  %229 = vmatprep.subr.mxu0 0.0
  %230 = vmatpush1.msra.mxu0 0.0
  %231 = vmatprep.subr.mxu0 0.0
  %232 = vmatpush1.msra.mxu0 %v193
  %233 = vmatprep.subr.mxu0 0.0
  %234 = vmatpush2.msra.mxu0 0.0
  %235 = vmatprep.subr.mxu0 0.0
  %236 = vmatpush2.msra.mxu0 0.0
  %237 = vmatprep.subr.mxu0 0.0
  %238 = vmatpush2.msra.mxu0 0.0
  %239 = vmatprep.subr.mxu0 0.0
  %240 = vmatpush2.msra.mxu0 0.0
  %241 = vmatprep.subr.mxu0 0.0
  %242 = vmatpush2.msra.mxu0 0.0
  %243 = vmatprep.subr.mxu0 0.0
  %244 = vmatpush2.msra.mxu0 0.0
  %245 = vmatprep.subr.mxu0 0.0
  %246 = vmatpush2.msra.mxu0 0.0
  %247 = vmatprep.subr.mxu0 0.0
  %248 = vmatpush2.msra.mxu0 0.0
  %249 = vmatprep.subr.mxu0 0.0
  %250 = vmatpush2.msra.mxu0 0.0
  %251 = vmatprep.subr.mxu0 0.0
  %252 = vmatpush2.msra.mxu0 0.0
  %253 = vmatprep.subr.mxu0 0.0
  %254 = vmatpush2.msra.mxu0 0.0
  %255 = vmatprep.subr.mxu0 0.0
  %256 = vmatpush2.msra.mxu0 0.0
  %257 = vmatprep.subr.mxu0 0.0
  %258 = vmatpush2.msra.mxu0 0.0
  %259 = vmatprep.subr.mxu0 0.0
  %260 = vmatpush2.msra.mxu0 0.0
  %261 = vmatprep.subr.mxu0 0.0
  %262 = vmatpush2.msra.mxu0 0.0
  %263 = vmatprep.subr.mxu0 0.0
  %264 = vmatpush2.msra.mxu0 0.0
  %265 = vmatprep.mubr.f32.mxu0 0.0
  %266 = vmatmul.mubr.f32.gmra.mxu0 %v199
  %v267 = vpop.f32.mrf.mxu0
  %v268 = vadd.f32 %v197, %v267
  %v269 = vpop.f32.mrf.mxu0
  %270 = vdwg.mxu0
  %v271 = vmax.f32 %v268, 0.0
  %272 = vst [vmem:[%s3] sm:$0xff] %v271
  // Predicated region
  $region14: #{downds_forward.1} parent=0 // pred_check
    _
  $region15: #{downds_forward.1} parent=0 // pred_check_branch
    %274 = sbr.rel (0) target = $region17
  $region16: #{downds_forward.1} parent=0 // pred_region
    _
  $region17: #{downds_forward.1} parent=0 // pred_fallthru
    _
  // Predicated region
  $region18: #{downds_forward.1} parent=0 // pred_check
    _
  $region19: #{downds_forward.1} parent=0 // pred_check_branch
    %276 = sbr.rel (0) target = $region21
  $region20: #{downds_forward.1} parent=0 // pred_region
    _
  $region21: #{downds_forward.1} parent=0 // pred_fallthru
    _

</llo_original>
